<compile_context>
chip_gen: v7x
topology: tpu7x:2x2x1
jax: 0.10.0
libtpu: 0.0.40
codegen_flags: <defaults>
</compile_context>

<pallas_src>
import jax
import jax.numpy as jnp
from jax.experimental import pallas as pl
from jax.experimental.pallas import tpu as pltpu


def _attention_kernel(h_ref, enc_ref, out_ref, m_sc, l_sc, acc_sc):
    """One (batch-tile, seq-tile) step of attention with online softmax.

    h_ref:   (TB, H)         last-layer decoder hidden for this batch tile
    enc_ref: (TS, TB, H)     encoder-output chunk (native (S, B, H) layout)
    out_ref: (TB, H)         context vectors (written on the last seq step)
    m_sc:    (1, TB, 1) f32  running max of scores
    l_sc:    (1, TB, 1) f32  running softmax denominator
    acc_sc:  (TB, H)    f32  running weighted sum of encoder outputs
    """
    s_idx = pl.program_id(1)

    @pl.when(s_idx == 0)
    def _():
        m_sc[...] = jnp.full_like(m_sc, -jnp.inf)
        l_sc[...] = jnp.zeros_like(l_sc)
        acc_sc[...] = jnp.zeros_like(acc_sc)

    h = h_ref[...].astype(jnp.float32)                       # (TB, H)

    # Pass 1: scores[s, b] = <enc[s, b, :], h[b, :]>, kept lane-replicated as
    # (TS, TB, 1) (keepdims) so nothing later has to move lanes<->sublanes.
    scores = jnp.sum(enc_ref[...].astype(jnp.float32) * h[None, :, :],
                     axis=-1, keepdims=True)                 # (TS, TB, 1)

    m_prev = m_sc[...]                                       # (1, TB, 1)
    m_new = jnp.maximum(m_prev, jnp.max(scores, axis=0, keepdims=True))
    alpha = jnp.exp(m_prev - m_new)                          # (1, TB, 1)
    e = jnp.exp(scores - m_new)                              # (TS, TB, 1)

    l_sc[...] = alpha * l_sc[...] + jnp.sum(e, axis=0, keepdims=True)
    # Pass 2: re-read enc from the resident (pipelined) VMEM block; do not
    # keep a full f32 copy of the tile live across both passes.
    acc_sc[...] = (alpha[0] * acc_sc[...]
                   + jnp.sum(e * enc_ref[...].astype(jnp.float32), axis=0))
    m_sc[...] = m_new

    @pl.when(s_idx == pl.num_programs(1) - 1)
    def _():
        # Exact divide (not the approx EUP reciprocal) -> tight parity with
        # the reference softmax.
        out_ref[...] = (acc_sc[...] / l_sc[0]).astype(out_ref.dtype)


def _sublane_pack(dtype):
    itemsize = jnp.dtype(dtype).itemsize
    return max(8, 32 // max(1, itemsize))     # 8 for f32, 16 for bf16, 32 for i8


def _choose_batch_tile(B, pack, max_tb, min_grid=4):
    """Largest batch tile that divides B, is sublane-pack aligned (or == B),
    and leaves at least ~min_grid grid steps for pipeline overlap."""
    max_tb = max(1, min(max_tb, B))
    grid_target = max(1, min(min_grid, B // pack))
    cap = max(1, min(max_tb, B // grid_target))
    for cand in range(cap, 0, -1):            # aligned divisors of B
        if B % cand == 0 and cand % pack == 0:
            return cand
    if B <= max_tb:                           # full batch dim is always legal
        return B
    for cand in range(cap, 0, -1):            # any divisor (last resort)
        if B % cand == 0:
            return cand
    return 1


def _choose_seq_tile(S, row_bytes, budget, grid_b, max_ts, min_total_steps=4):
    """Largest divisor of S whose double-buffered (TS, TB, H) block fits the
    VMEM budget; also capped so the total grid has a few steps to pipeline."""
    cap = max(1, min(S, budget // max(1, 2 * row_bytes)))
    cap = min(cap, max(1, max_ts))
    if grid_b < min_total_steps:
        want_gs = -(-min_total_steps // max(1, grid_b))
        cap = min(cap, max(1, S // want_gs))
    for cand in range(cap, 0, -1):
        if S % cand == 0:
            return cand
    return 1


def attention_forward(hidden, encoder_outputs, *,
                      max_batch_tile=None, max_seq_tile=None):
    """Pallas implementation of Attention.forward.

    hidden:          (num_layers, B, H)
    encoder_outputs: (S, B, H)
    returns context: (B, H)
    """
    num_layers, B, H = hidden.shape
    S = encoder_outputs.shape[0]
    assert encoder_outputs.shape == (S, B, H)

    # Only the last layer's hidden state is needed: tiny (B, H) slice.
    h_last = hidden[-1]

    # Generation-aware VMEM budgets (v7x: 64 MiB/TC; v5e/v6e: 128 MiB).
    try:
        vmem_cap = int(pltpu.get_tpu_info().vmem_capacity_bytes)
    except Exception:
        vmem_cap = 64 * 1024 * 1024           # conservative default
    if vmem_cap >= 100 * 1024 * 1024:         # v5e / v6e class
        vmem_limit = 96 * 1024 * 1024
        enc_budget = 48 * 1024 * 1024
    else:                                     # v7x class (or unknown)
        vmem_limit = 52 * 1024 * 1024
        enc_budget = 16 * 1024 * 1024

    itemsize = jnp.dtype(encoder_outputs.dtype).itemsize
    pack = _sublane_pack(encoder_outputs.dtype)

    tb = _choose_batch_tile(B, pack, max_batch_tile if max_batch_tile else B)
    grid_b = B // tb
    row_bytes = tb * H * itemsize             # contiguous bytes per strided DMA row
    ts = _choose_seq_tile(S, row_bytes, enc_budget, grid_b,
                          max_seq_tile if max_seq_tile else S)
    grid_s = S // ts

    out = pl.pallas_call(
        _attention_kernel,
        out_shape=jax.ShapeDtypeStruct((B, H), hidden.dtype),
        grid_spec=pltpu.PrefetchScalarGridSpec(
            num_scalar_prefetch=0,
            grid=(grid_b, grid_s),
            in_specs=[
                # last hidden state, (TB, H) per batch step
                pl.BlockSpec((tb, H), lambda b, s: (b, 0)),
                # encoder outputs in native (S, B, H) layout: (TS, TB, H)
                pl.BlockSpec((ts, tb, H), lambda b, s: (s, b, 0)),
            ],
            # same output block across the seq axis -> resident accumulator
            out_specs=pl.BlockSpec((tb, H), lambda b, s: (b, 0)),
            scratch_shapes=[
                pltpu.VMEM((1, tb, 1), jnp.float32),   # running max m
                pltpu.VMEM((1, tb, 1), jnp.float32),   # running denom l
                pltpu.VMEM((tb, H), jnp.float32),      # weighted-sum acc
            ],
        ),
        compiler_params=pltpu.CompilerParams(
            dimension_semantics=("parallel", "arbitrary"),
            vmem_limit_bytes=vmem_limit,
        ),
    )(h_last, encoder_outputs)
    return out


def attention_reference(hidden, encoder_outputs):
    """Pure-JAX reference matching the PyTorch module exactly."""
    h = hidden[-1][..., None]                                  # (B, H, 1)
    enc = jnp.transpose(encoder_outputs, (1, 0, 2))            # (B, S, H)
    scores = jnp.squeeze(jnp.matmul(enc, h), axis=2)           # (B, S)
    weights = jax.nn.softmax(scores, axis=1)                   # (B, S)
    context = jnp.squeeze(jnp.matmul(weights[:, None, :], enc), axis=1)
    return context                                             # (B, H)


if __name__ == "__main__":
    key = jax.random.PRNGKey(0)
    k1, k2, k3, k4 = jax.random.split(key, 4)

    # --- Test 1: small shapes implied by the module ---------------------------
    # (grid_b == 1, so the seq axis is split -> exercises the online softmax)
    num_layers, B, S, H = 2, 2, 8, 32
    hidden = jax.random.normal(k1, (num_layers, B, H), dtype=jnp.float32)
    encoder_outputs = jax.random.normal(k2, (S, B, H), dtype=jnp.float32)

    ctx = attention_forward(hidden, encoder_outputs)
    jax.block_until_ready(ctx)
    ref = attention_reference(hidden, encoder_outputs)
    assert ctx.shape == (B, H)
    err = float(jnp.max(jnp.abs(ctx - ref)))
    assert jnp.allclose(ctx, ref, atol=1e-4, rtol=1e-4), f"max abs err {err}"

    # --- Test 2: multi-step batch grid (grid_b=4) x seq grid (grid_s=2) -------
    num_layers2, B2, S2, H2 = 2, 32, 16, 128
    hidden2 = jax.random.normal(k3, (num_layers2, B2, H2), dtype=jnp.float32)
    encoder_outputs2 = jax.random.normal(k4, (S2, B2, H2), dtype=jnp.float32)

    ctx2 = attention_forward(hidden2, encoder_outputs2,
                             max_batch_tile=8, max_seq_tile=8)
    jax.block_until_ready(ctx2)
    ref2 = attention_reference(hidden2, encoder_outputs2)
    assert ctx2.shape == (B2, H2)
    err2 = float(jnp.max(jnp.abs(ctx2 - ref2)))
    assert jnp.allclose(ctx2, ref2, atol=1e-4, rtol=1e-4), f"max abs err {err2}"

    print("KERNEL_OK")
</pallas_src>

<mosaic_0001>
module attributes {stable_mosaic.version = 11 : i64} {
  func.func @_attention_kernel(%arg0: i32, %arg1: i32, %arg2: memref<2x32xf32, #tpu.memory_space<vmem>>, %arg3: memref<2x2x32xf32, #tpu.memory_space<vmem>>, %arg4: memref<2x32xf32, #tpu.memory_space<vmem>>, %arg5: memref<1x2x1xf32, #tpu.memory_space<vmem>>, %arg6: memref<1x2x1xf32, #tpu.memory_space<vmem>>, %arg7: memref<2x32xf32, #tpu.memory_space<vmem>>) attributes {dimension_semantics = [#tpu.dimension_semantics<parallel>, #tpu.dimension_semantics<arbitrary>], iteration_bounds = array<i64: 1, 4>, scalar_prefetch = 0 : i64, scratch_operands = 3 : i64, tpu.core_type = #tpu.core_type<tc>, window_params = [{transform_indices = @transform_0, window_bounds = array<i64: 2, 32>}, {transform_indices = @transform_1, window_bounds = array<i64: 2, 2, 32>}, {transform_indices = @transform_2, window_bounds = array<i64: 2, 32>}]} {
    %c0_i32 = arith.constant 0 : i32
    %0 = arith.cmpi eq, %arg1, %c0_i32 : i32
    %1 = arith.extui %0 : i1 to i32
    %c0_i32_0 = arith.constant 0 : i32
    %2 = arith.cmpi ne, %1, %c0_i32_0 : i32
    scf.if %2 {
      %cst_28 = arith.constant 0xFF800000 : f32
      %39 = vector.broadcast %cst_28 : f32 to vector<1x2x1xf32>
      %c0_29 = arith.constant 0 : index
      %c0_30 = arith.constant 0 : index
      %c0_31 = arith.constant 0 : index
      %40 = vector.load %arg5[%c0_29, %c0_30, %c0_31] : memref<1x2x1xf32, #tpu.memory_space<vmem>>, vector<1x2x1xf32>
      tpu.vector_store %arg5[%c0_29, %c0_30, %c0_31], %39 {strides = array<i32>} : memref<1x2x1xf32, #tpu.memory_space<vmem>>, vector<1x2x1xf32>,
      %cst_32 = arith.constant 0.000000e+00 : f32
      %41 = vector.broadcast %cst_32 : f32 to vector<1x2x1xf32>
      %c0_33 = arith.constant 0 : index
      %c0_34 = arith.constant 0 : index
      %c0_35 = arith.constant 0 : index
      %42 = vector.load %arg6[%c0_33, %c0_34, %c0_35] : memref<1x2x1xf32, #tpu.memory_space<vmem>>, vector<1x2x1xf32>
      tpu.vector_store %arg6[%c0_33, %c0_34, %c0_35], %41 {strides = array<i32>} : memref<1x2x1xf32, #tpu.memory_space<vmem>>, vector<1x2x1xf32>,
      %cst_36 = arith.constant 0.000000e+00 : f32
      %43 = vector.broadcast %cst_36 : f32 to vector<2x32xf32>
      %c0_37 = arith.constant 0 : index
      %c0_38 = arith.constant 0 : index
      %44 = vector.load %arg7[%c0_37, %c0_38] : memref<2x32xf32, #tpu.memory_space<vmem>>, vector<2x32xf32>
      tpu.vector_store %arg7[%c0_37, %c0_38], %43 {strides = array<i32>} : memref<2x32xf32, #tpu.memory_space<vmem>>, vector<2x32xf32>,
    } else {
    }
    %c0 = arith.constant 0 : index
    %c0_1 = arith.constant 0 : index
    %3 = vector.load %arg2[%c0, %c0_1] : memref<2x32xf32, #tpu.memory_space<vmem>>, vector<2x32xf32>
    %c0_2 = arith.constant 0 : index
    %c0_3 = arith.constant 0 : index
    %c0_4 = arith.constant 0 : index
    %4 = vector.load %arg3[%c0_2, %c0_3, %c0_4] : memref<2x2x32xf32, #tpu.memory_space<vmem>>, vector<2x2x32xf32>
    %5 = vector.shape_cast %3 : vector<2x32xf32> to vector<1x2x32xf32>
    %6 = vector.broadcast %5 : vector<1x2x32xf32> to vector<2x2x32xf32>
    %7 = arith.mulf %4, %6 : vector<2x2x32xf32>
    %cst = arith.constant dense<0.000000e+00> : vector<2x2xf32>
    %8 = vector.multi_reduction <add>, %7, %cst [2] : vector<2x2x32xf32> to vector<2x2xf32>
    %9 = vector.shape_cast %8 : vector<2x2xf32> to vector<2x2x1xf32>
    %c0_5 = arith.constant 0 : index
    %c0_6 = arith.constant 0 : index
    %c0_7 = arith.constant 0 : index
    %10 = vector.load %arg5[%c0_5, %c0_6, %c0_7] : memref<1x2x1xf32, #tpu.memory_space<vmem>>, vector<1x2x1xf32>
    %cst_8 = arith.constant dense<0xFF800000> : vector<2x1xf32>
    %11 = vector.multi_reduction <maximumf>, %9, %cst_8 [0] : vector<2x2x1xf32> to vector<2x1xf32>
    %12 = vector.shape_cast %11 : vector<2x1xf32> to vector<1x2x1xf32>
    %13 = arith.maximumf %10, %12 : vector<1x2x1xf32>
    %14 = arith.subf %10, %13 : vector<1x2x1xf32>
    %15 = math.exp %14 : vector<1x2x1xf32>
    %16 = vector.broadcast %13 : vector<1x2x1xf32> to vector<2x2x1xf32>
    %17 = arith.subf %9, %16 : vector<2x2x1xf32>
    %18 = math.exp %17 : vector<2x2x1xf32>
    %c0_9 = arith.constant 0 : index
    %c0_10 = arith.constant 0 : index
    %c0_11 = arith.constant 0 : index
    %19 = vector.load %arg6[%c0_9, %c0_10, %c0_11] : memref<1x2x1xf32, #tpu.memory_space<vmem>>, vector<1x2x1xf32>
    %20 = arith.mulf %15, %19 : vector<1x2x1xf32>
    %cst_12 = arith.constant dense<0.000000e+00> : vector<2x1xf32>
    %21 = vector.multi_reduction <add>, %18, %cst_12 [0] : vector<2x2x1xf32> to vector<2x1xf32>
    %22 = vector.shape_cast %21 : vector<2x1xf32> to vector<1x2x1xf32>
    %23 = arith.addf %20, %22 : vector<1x2x1xf32>
    %c0_13 = arith.constant 0 : index
    %c0_14 = arith.constant 0 : index
    %c0_15 = arith.constant 0 : index
    %24 = vector.load %arg6[%c0_13, %c0_14, %c0_15] : memref<1x2x1xf32, #tpu.memory_space<vmem>>, vector<1x2x1xf32>
    tpu.vector_store %arg6[%c0_13, %c0_14, %c0_15], %23 {strides = array<i32>} : memref<1x2x1xf32, #tpu.memory_space<vmem>>, vector<1x2x1xf32>,
    %25 = vector.shape_cast %15 : vector<1x2x1xf32> to vector<2x1xf32>
    %c0_16 = arith.constant 0 : index
    %c0_17 = arith.constant 0 : index
    %26 = vector.load %arg7[%c0_16, %c0_17] : memref<2x32xf32, #tpu.memory_space<vmem>>, vector<2x32xf32>
    %27 = vector.broadcast %25 : vector<2x1xf32> to vector<2x32xf32>
    %28 = arith.mulf %27, %26 : vector<2x32xf32>
    %c0_18 = arith.constant 0 : index
    %c0_19 = arith.constant 0 : index
    %c0_20 = arith.constant 0 : index
    %29 = vector.load %arg3[%c0_18, %c0_19, %c0_20] : memref<2x2x32xf32, #tpu.memory_space<vmem>>, vector<2x2x32xf32>
    %30 = vector.broadcast %18 : vector<2x2x1xf32> to vector<2x2x32xf32>
    %31 = arith.mulf %30, %29 : vector<2x2x32xf32>
    %cst_21 = arith.constant dense<0.000000e+00> : vector<2x32xf32>
    %32 = vector.multi_reduction <add>, %31, %cst_21 [0] : vector<2x2x32xf32> to vector<2x32xf32>
    %33 = arith.addf %28, %32 : vector<2x32xf32>
    %c0_22 = arith.constant 0 : index
    %c0_23 = arith.constant 0 : index
    %34 = vector.load %arg7[%c0_22, %c0_23] : memref<2x32xf32, #tpu.memory_space<vmem>>, vector<2x32xf32>
    tpu.vector_store %arg7[%c0_22, %c0_23], %33 {strides = array<i32>} : memref<2x32xf32, #tpu.memory_space<vmem>>, vector<2x32xf32>,
    %c0_24 = arith.constant 0 : index
    %c0_25 = arith.constant 0 : index
    %c0_26 = arith.constant 0 : index
    %35 = vector.load %arg5[%c0_24, %c0_25, %c0_26] : memref<1x2x1xf32, #tpu.memory_space<vmem>>, vector<1x2x1xf32>
    tpu.vector_store %arg5[%c0_24, %c0_25, %c0_26], %13 {strides = array<i32>} : memref<1x2x1xf32, #tpu.memory_space<vmem>>, vector<1x2x1xf32>,
    %c3_i32 = arith.constant 3 : i32
    %36 = arith.cmpi eq, %arg1, %c3_i32 : i32
    %37 = arith.extui %36 : i1 to i32
    %c0_i32_27 = arith.constant 0 : i32
    %38 = arith.cmpi ne, %37, %c0_i32_27 : i32
    scf.if %38 {
      %c0_28 = arith.constant 0 : index
      %c0_29 = arith.constant 0 : index
      %39 = vector.load %arg7[%c0_28, %c0_29] : memref<2x32xf32, #tpu.memory_space<vmem>>, vector<2x32xf32>
      %c0_30 = arith.constant 0 : index
      %c0_31 = arith.constant 0 : index
      %c0_32 = arith.constant 0 : index
      %40 = vector.load %arg6[%c0_30, %c0_31, %c0_32] : memref<1x2x1xf32, #tpu.memory_space<vmem>>, vector<1x2x1xf32>
      %41 = vector.shape_cast %40 : vector<1x2x1xf32> to vector<2x1xf32>
      %42 = vector.broadcast %41 : vector<2x1xf32> to vector<2x32xf32>
      %43 = arith.divf %39, %42 : vector<2x32xf32>
      %c0_33 = arith.constant 0 : index
      %c0_34 = arith.constant 0 : index
      %44 = vector.load %arg4[%c0_33, %c0_34] : memref<2x32xf32, #tpu.memory_space<vmem>>, vector<2x32xf32>
      tpu.vector_store %arg4[%c0_33, %c0_34], %43 {strides = array<i32>} : memref<2x32xf32, #tpu.memory_space<vmem>>, vector<2x32xf32>,
    } else {
    }
    return
  }
  func.func @transform_0(%arg0: i32, %arg1: i32) -> (i32, i32) {
    %c0_i32 = arith.constant 0 : i32
    %c0_i32_0 = arith.constant 0 : i32
    return %arg0, %c0_i32 : i32, i32
  }
  func.func @transform_1(%arg0: i32, %arg1: i32) -> (i32, i32, i32) {
    %c0_i32 = arith.constant 0 : i32
    %c0_i32_0 = arith.constant 0 : i32
    return %arg1, %arg0, %c0_i32 : i32, i32, i32
  }
  func.func @transform_2(%arg0: i32, %arg1: i32) -> (i32, i32) {
    %c0_i32 = arith.constant 0 : i32
    %c0_i32_0 = arith.constant 0 : i32
    return %arg0, %c0_i32 : i32, i32
  }
}

</mosaic_0001>

<llo_original>
// kernel: tpu_custom_call.1
$region0: #{tpu_custom_call.1}
  #allocation0 [shape = 'u32[]', space=smem, size = 0x4, offset = 0x4, fixed_abs, tag = 'smem constant byte address 0x4 - core index']
  #allocation1 [shape = 'u32[144,128]{1,0:T(1,128)}', space=vmem, size = 0x12000, scoped, tag = 'internal scratch']
  #allocation2 [shape = 'f32[1,2,1]{2,1,0:T(2,128)}', space=vmem, size = 0x400, scoped, tag = 'scratch operand']
  #allocation3 [shape = 'f32[1,2,1]{2,1,0:T(2,128)}', space=vmem, size = 0x400, scoped, tag = 'scratch operand']
  #allocation4 [shape = 'f32[2,32]{1,0:T(2,128)}', space=vmem, size = 0x400, scoped, tag = 'scratch operand']
  %s0 = inlined_call_operand.hbm [shape: f32[2,32], index: 0, kind: input, shape index: {}]
  %s1 = inlined_call_operand.hbm [shape: f32[8,2,32], index: 1, kind: input, shape index: {}]
  %s2 = inlined_call_operand.hbm [shape: f32[2,32], index: 2, kind: output, shape index: {}]
  %s3 = sld [smem:[#allocation0]]
  $region57: #{tpu_custom_call.1} parent=0
    _
  %s5 = ssub.s32 1, %s3
  %s6 = scalar_select 0, %s5, %s3
  $region1: #{tpu_custom_call.1} parent=0
    #allocation5 [shape = 'u8[1024]{0}', space=vmem, size = 0x400, scoped, tag = 'input window, operand 0, single buffered']
    #allocation6 [shape = 's32[2]{0}', space=sflag, size = 0x8, scoped, tag = 'scoped memory for tpu_custom_call.1']
    #allocation7 [shape = 's32[2]{0}', space=sflag, size = 0x8, scoped, tag = 'scoped memory for tpu_custom_call.1']
    #allocation8 [shape = 'u8[4096]{0}', space=vmem, size = 0x1000, scoped, tag = 'input window, operand 1']
    #allocation9 [shape = 's32[2]{0}', space=sflag, size = 0x8, scoped, tag = 'scoped memory for tpu_custom_call.1']
    #allocation10 [shape = 'u8[1024]{0}', space=vmem, size = 0x400, scoped, tag = 'output window, operand 0, single buffered']
    %7 = vsyncpa [#allocation6], 0
    %8 = vsyncpa [#allocation9], 0
    %s9 = scalar_lea.sflag [#allocation9], 1
    %10 = vsyncpa %s9, 0
    %11 = vsyncpa [#allocation7], 0
    loop: start=0, step=1, limit=6
    $region2: #{tpu_custom_call.1} parent=1 // loop_pre_header
      _
    $region3: #{tpu_custom_call.1} parent=1 // loop_header
      %s13 = sphi 0, %s17
      %p14 = scmp.ge.s32.totalorder %s13, 6
      %s20 = sphi 0, %s32
      %s21 = sphi 0, %s28
      %s22 = sphi 0, %s20
      %s23 = sphi 0, %s21
      %s24 = sphi 0, %s22
      %s25 = sphi 0, %s23
      %s35 = sphi 0, %s37
      %s38 = sphi 0, %s35
      %s39 = sphi 0, %s38
      %s55 = sphi 0, %s39
      %s63 = sphi 0, %s65
      %s66 = sphi 0, %s63
      %s67 = sphi 0, %s66
      %s83 = sphi 0, %s67
      %s89 = sphi 0, %s91
      %s92 = sphi 0, %s89
      %s93 = sphi 0, %s92
      %s109 = sphi 0, %s93
    $region4: #{tpu_custom_call.1} parent=1 // loop_header_branch
      %16 = sbr.rel (%p14) target = $region8
    $region5: #{tpu_custom_call.1} parent=1 // loop_body
      %s18 = ssub.s32 %s13, 1
      %s19 = ssub.s32 %s13, 2
      %s26 = sadd.s32 1, %s21
      %p27 = scmp.ge.s32.totalorder %s26, 4
      %s28 = scalar_select %p27, 0, %s26
      %s29 = sadd.s32 1, %s20
      %s30 = scalar_select %p27, %s29, %s20
      %p31 = scmp.ge.s32.totalorder %s30, 1
      %s32 = scalar_select %p31, 0, %s30
      %s33 = ssub.s32 %s20, %s32
      %p34 = scmp.eq.s32.totalorder %s33, 0
      %s36 = sadd.s32 %s35, 1
      %s37 = scalar_select %p34, %s35, %s36
      %p40 = pneg %p34
      %p41 = scmp.eq.s32.totalorder %s13, 3
      %p42 = por %p40, %p41
      %p43 = scmp.ne.s32.totalorder %s35, %s38
      %p44 = scmp.eq.s32.totalorder %s13, 0
      %p45 = por %p43, %p44
      %p46 = scmp.ne.s32.totalorder %s35, %s38
      %p47 = scmp.eq.s32.totalorder %s18, 3
      %p48 = por %p46, %p47
      %p49 = scmp.ne.s32.totalorder %s38, %s39
      %p50 = scmp.eq.s32.totalorder %s18, 0
      %p51 = por %p49, %p50
      %p52 = scmp.ne.s32.totalorder %s38, %s39
      %p53 = scmp.eq.s32.totalorder %s19, 3
      %p54 = por %p52, %p53
      %p56 = scmp.ne.s32.totalorder %s39, %s55
      %p57 = scmp.eq.s32.totalorder %s19, 0
      %p58 = por %p56, %p57
      %s59 = ssub.s32 %s21, %s28
      %s60 = ssub.s32 %s20, %s32
      %s61 = sor.u32 %s59, %s60
      %p62 = scmp.eq.s32.totalorder %s61, 0
      %s64 = sadd.s32 %s63, 1
      %s65 = scalar_select %p62, %s63, %s64
      %p68 = pneg %p62
      %p69 = scmp.eq.s32.totalorder %s13, 3
      %p70 = por %p68, %p69
      %p71 = scmp.ne.s32.totalorder %s63, %s66
      %p72 = scmp.eq.s32.totalorder %s13, 0
      %p73 = por %p71, %p72
      %p74 = scmp.ne.s32.totalorder %s63, %s66
      %p75 = scmp.eq.s32.totalorder %s18, 3
      %p76 = por %p74, %p75
      %p77 = scmp.ne.s32.totalorder %s66, %s67
      %p78 = scmp.eq.s32.totalorder %s18, 0
      %p79 = por %p77, %p78
      %p80 = scmp.ne.s32.totalorder %s66, %s67
      %p81 = scmp.eq.s32.totalorder %s19, 3
      %p82 = por %p80, %p81
      %p84 = scmp.ne.s32.totalorder %s67, %s83
      %p85 = scmp.eq.s32.totalorder %s19, 0
      %p86 = por %p84, %p85
      %s87 = ssub.s32 %s20, %s32
      %p88 = scmp.eq.s32.totalorder %s87, 0
      %s90 = sadd.s32 %s89, 1
      %s91 = scalar_select %p88, %s89, %s90
      %p94 = pneg %p88
      %p95 = scmp.eq.s32.totalorder %s13, 3
      %p96 = por %p94, %p95
      %p97 = scmp.ne.s32.totalorder %s89, %s92
      %p98 = scmp.eq.s32.totalorder %s13, 0
      %p99 = por %p97, %p98
      %p100 = scmp.ne.s32.totalorder %s89, %s92
      %p101 = scmp.eq.s32.totalorder %s18, 3
      %p102 = por %p100, %p101
      %p103 = scmp.ne.s32.totalorder %s92, %s93
      %p104 = scmp.eq.s32.totalorder %s18, 0
      %p105 = por %p103, %p104
      %p106 = scmp.ne.s32.totalorder %s92, %s93
      %p107 = scmp.eq.s32.totalorder %s19, 3
      %p108 = por %p106, %p107
      %p110 = scmp.ne.s32.totalorder %s93, %s109
      %p111 = scmp.eq.s32.totalorder %s19, 0
      %p112 = por %p110, %p111
      %p113 = scmp.le.s32.totalorder 1, %s13
      %p114 = scmp.lt.s32.totalorder %s13, 5
      %p115 = pnand %p113, %p114
      %p116 = pneg %p115
      // Predicated region
      $region9: #{tpu_custom_call.1} parent=5 // pred_check
        _
      $region10: #{tpu_custom_call.1} parent=5 // pred_check_branch
        %118 = sbr.rel (%p115) target = $region12
      $region11: #{tpu_custom_call.1} parent=5 // pred_region
        %s119 = ssub.s32 %s13, 1
        // Predicated region
        $region13: #{tpu_custom_call.1} parent=11 // pred_check
          %p120 = pneg %p51
        $region14: #{tpu_custom_call.1} parent=11 // pred_check_branch
          %122 = sbr.rel (%p120) target = $region16
        $region15: #{tpu_custom_call.1} parent=11 // pred_region
          %s124 = ssub.s32 32, 32
          %125 = vsyncadd [#allocation6], %s124
          %s126 = smul.addr %s22, 32
          %s127 = scalar_lea.hbm %s0, %s126
          %s129 = sshll.u32 [#allocation5], 4
          %s130 = int_to_ptr.vmem [resolvable:$true] %s129
          %132 = dma.hbm_to_vmem [thread:$0]  %s127, 32, %s130, [#allocation6]
        $region16: #{tpu_custom_call.1} parent=11 // pred_fallthru
          _
      $region12: #{tpu_custom_call.1} parent=5 // pred_fallthru
        _
      %p133 = scmp.lt.s32.totalorder %s13, 4
      // Predicated region
      $region17: #{tpu_custom_call.1} parent=5 // pred_check
        %p134 = pneg %p133
      $region18: #{tpu_custom_call.1} parent=5 // pred_check_branch
        %136 = sbr.rel (%p134) target = $region20
      $region19: #{tpu_custom_call.1} parent=5 // pred_region
        // Predicated region
        $region21: #{tpu_custom_call.1} parent=19 // pred_check
          %p137 = pneg %p73
        $region22: #{tpu_custom_call.1} parent=19 // pred_check_branch
          %139 = sbr.rel (%p137) target = $region24
        $region23: #{tpu_custom_call.1} parent=19 // pred_region
          %s140 = sand.u32 %s63, 1
          %s141 = scalar_lea.sflag [#allocation9], %s140
          %s142 = sand.u32 %s63, 1
          %s143 = smul.addr %s142, 4
          %s144 = scalar_lea.vmem [#allocation8], %s143
          %s145 = smul.u32 2, %s21
          %s147 = ssub.s32 64, 64
          %148 = vsyncadd %s141, %s147
          %s149 = sadd.s32 %s20, %s145
          %s150 = smul.addr %s149, 32
          %s151 = scalar_lea.hbm %s1, %s150
          %s152 = sshll.u32 %s144, 4
          %s153 = int_to_ptr.vmem [resolvable:$true] %s152
          %158 = dma.hbm_to_vmem [thread:$0]  %s151, 64, %s153, %s141, 32, 32, 2
        $region24: #{tpu_custom_call.1} parent=19 // pred_fallthru
          _
      $region20: #{tpu_custom_call.1} parent=5 // pred_fallthru
        _
      %p159 = scmp.le.s32.totalorder 1, %s13
      %p160 = scmp.lt.s32.totalorder %s13, 5
      %p161 = pnand %p159, %p160
      %p162 = pneg %p161
      // Predicated region
      $region25: #{tpu_custom_call.1} parent=5 // pred_check
        _
      $region26: #{tpu_custom_call.1} parent=5 // pred_check_branch
        %164 = sbr.rel (%p161) target = $region28
      $region27: #{tpu_custom_call.1} parent=5 // pred_region
        %s165 = ssub.s32 %s13, 1
        // Predicated region
        $region29: #{tpu_custom_call.1} parent=27 // pred_check
          %p166 = pneg %p51
        $region30: #{tpu_custom_call.1} parent=27 // pred_check_branch
          %168 = sbr.rel (%p166) target = $region32
        $region31: #{tpu_custom_call.1} parent=27 // pred_region
          %169 = dma.done [#allocation6], 32
        $region32: #{tpu_custom_call.1} parent=27 // pred_fallthru
          _
        %s170 = sand.u32 %s66, 1
        %s171 = scalar_lea.sflag [#allocation9], %s170
        %s172 = sand.u32 %s66, 1
        %s173 = smul.addr %s172, 4
        %s174 = scalar_lea.vmem [#allocation8], %s173
        // Predicated region
        $region33: #{tpu_custom_call.1} parent=27 // pred_check
          %p175 = pneg %p79
        $region34: #{tpu_custom_call.1} parent=27 // pred_check_branch
          %177 = sbr.rel (%p175) target = $region36
        $region35: #{tpu_custom_call.1} parent=27 // pred_region
          %178 = dma.done %s171, 64
        $region36: #{tpu_custom_call.1} parent=27 // pred_fallthru
          _
        %p179 = pneg %p51
        %p180 = pneg %p48
        %s181 = sand.u32 %s66, 1
        %s182 = scalar_lea.sflag [#allocation9], %s181
        %s183 = sand.u32 %s66, 1
        %s184 = smul.addr %s183, 4
        %s185 = scalar_lea.vmem [#allocation8], %s184
        %p186 = pneg %p79
        %p187 = pneg %p76
        %p188 = pneg %p105
        %p189 = pneg %p102
        %s190 = smul.u32 2, %s23
        %p191 = scmp.eq.s32.totalorder %s23, 0
        // Predicated region
        $region37: #{tpu_custom_call.1} parent=27 // pred_check
          %p192 = pneg %p191
        $region38: #{tpu_custom_call.1} parent=27 // pred_check_branch
          %194 = sbr.rel (%p192) target = $region40
        $region39: #{tpu_custom_call.1} parent=27 // pred_region
          %vm195 = vcmask 1024
          %196 = vst.msk [vmem:[#allocation2] sm:$0x3] %vm195, -inf
          %197 = vst.msk [vmem:[#allocation3] sm:$0x3] %vm195, 0.0
          %vm198 = vcmask 254976
          %199 = vst.msk [vmem:[#allocation4] sm:$0x3] %vm198, 0.0
        $region40: #{tpu_custom_call.1} parent=27 // pred_fallthru
          _
        %v200 = vld [vmem:[#allocation5] sm:$0x3]
        %v201 = vld [vmem:[%s174] sm:$0x3]
        %v202 = vld [vmem:[%s174 + $0x2] sm:$0x3]
        %v203 = vmul.f32 %v201, %v200
        %v204 = vmul.f32 %v202, %v200
        %vm205 = vcmask 254976
        %v206 = vsel %vm205, %v203, 0.0
        %207 = vadd.xlane.f32.xlu0 %v206
        %v208 = vpop.xlane.xlu0 %207
        %v209 = vsel %vm205, %v204, 0.0
        %210 = vadd.xlane.f32.xlu0 %v209
        %v211 = vpop.xlane.xlu0 %210
        %v212 = vld [vmem:[#allocation2] sm:$0x3]
        %vm213 = vcmask 1041408
        %v214 = vsel %vm213, %v208, -inf
        %v215 = vsel %vm213, %v211, -inf
        %v216 = vmax.f32 %v214, %v215
        %v217 = vmax.f32 %v212, %v216
        %v218 = vsub.f32 %v212, %v217
        %v219 = vmul.f32 %v218, 1.442695
        %v220 = vpow.pop %v219
        %v221 = vsub.f32 %v208, %v217
        %v222 = vsub.f32 %v211, %v217
        %v223 = vmul.f32 %v221, 1.442695
        %v224 = vpow.pop %v223
        %v225 = vmul.f32 %v222, 1.442695
        %v226 = vpow.pop %v225
        %v227 = vld [vmem:[#allocation3] sm:$0x3]
        %v228 = vmul.f32 %v220, %v227
        %vm229 = vcmask 1024
        %v230 = vsel %vm229, %v224, 0.0
        %v231 = vsel %vm229, %v226, 0.0
        %v232 = vadd.f32 %v230, %v231
        %v233 = vadd.f32 %v228, %v232
        %234 = vst.msk [vmem:[#allocation3] sm:$0x3] %vm229, %v233
        %v235 = vld [vmem:[#allocation4] sm:$0x3]
        %237 = vset.pattern.permute.xlu0 0
        %238 = vperm.xlu0 %237, %v220
        %v239 = vpop.permute.xlu0 %238
        %v241 = vmul.f32 %v239, %v235
        %v242 = vld [vmem:[%s174] sm:$0x3]
        %v243 = vld [vmem:[%s174 + $0x2] sm:$0x3]
        %245 = vset.pattern.permute.xlu0 0
        %246 = vperm.xlu0 %245, %v224
        %v247 = vpop.permute.xlu0 %246
        %250 = vset.pattern.permute.xlu0 0
        %251 = vperm.xlu0 %250, %v226
        %v252 = vpop.permute.xlu0 %251
        %v254 = vmul.f32 %v247, %v242
        %v255 = vmul.f32 %v252, %v243
        %v256 = vsel %vm205, %v254, 0.0
        %v257 = vsel %vm205, %v255, 0.0
        %v258 = vadd.f32 %v256, %v257
        %v259 = vadd.f32 %v241, %v258
        %260 = vst.msk [vmem:[#allocation4] sm:$0x3] %vm205, %v259
        %261 = vst.msk [vmem:[#allocation2] sm:$0x3] %vm229, %v217
        %p262 = scmp.eq.s32.totalorder %s23, 3
        // Predicated region
        $region41: #{tpu_custom_call.1} parent=27 // pred_check
          %p263 = pneg %p262
        $region42: #{tpu_custom_call.1} parent=27 // pred_check_branch
          %265 = sbr.rel (%p263) target = $region44
        $region43: #{tpu_custom_call.1} parent=27 // pred_region
          %v266 = vld [vmem:[#allocation4] sm:$0x3]
          %v267 = vld [vmem:[#allocation3] sm:$0x3]
          %269 = vset.pattern.permute.xlu0 0
          %270 = vperm.xlu0 %269, %v267
          %v271 = vpop.permute.xlu0 %270
          %v273 = vrcp.pop %v271
          %v274 = vmul.f32 %v266, %v273
          %275 = vst.msk [vmem:[#allocation10] sm:$0x3] %vm205, %v274
        $region44: #{tpu_custom_call.1} parent=27 // pred_fallthru
          _
        // Predicated region
        $region45: #{tpu_custom_call.1} parent=27 // pred_check
          %p276 = pneg %p102
        $region46: #{tpu_custom_call.1} parent=27 // pred_check_branch
          %278 = sbr.rel (%p276) target = $region48
        $region47: #{tpu_custom_call.1} parent=27 // pred_region
          %s280 = ssub.s32 32, 32
          %281 = vsyncadd [#allocation7], %s280
          %s282 = smul.addr %s22, 32
          %s283 = scalar_lea.hbm %s2, %s282
          %s285 = sshll.u32 [#allocation10], 4
          %s286 = int_to_ptr.vmem [resolvable:$true] %s285
          %288 = dma.vmem_to_hbm [thread:$0]  %s286, 32, %s283, [#allocation7]
        $region48: #{tpu_custom_call.1} parent=27 // pred_fallthru
          _
        // Predicated region
        $region49: #{tpu_custom_call.1} parent=27 // pred_check
          %p289 = pneg %p102
        $region50: #{tpu_custom_call.1} parent=27 // pred_check_branch
          %291 = sbr.rel (%p289) target = $region52
        $region51: #{tpu_custom_call.1} parent=27 // pred_region
          %292 = dma.done [#allocation7], 32
        $region52: #{tpu_custom_call.1} parent=27 // pred_fallthru
          _
      $region28: #{tpu_custom_call.1} parent=5 // pred_fallthru
        _
      %p293 = scmp.le.s32.totalorder 2, %s13
      // Predicated region
      $region53: #{tpu_custom_call.1} parent=5 // pred_check
        %p294 = pneg %p293
      $region54: #{tpu_custom_call.1} parent=5 // pred_check_branch
        %296 = sbr.rel (%p294) target = $region56
      $region55: #{tpu_custom_call.1} parent=5 // pred_region
        %s297 = ssub.s32 %s13, 2
      $region56: #{tpu_custom_call.1} parent=5 // pred_fallthru
        _
    $region6: #{tpu_custom_call.1} parent=1 // loop_footer
      %s17 = sadd.s32 1, %s13
    $region7: #{tpu_custom_call.1} parent=1 // loop_footer_branch
      %12 = sbr.rel target = $region3
    $region8: #{tpu_custom_call.1} parent=1 // loop_exit
      _
    %298 = vsyncpa [#allocation6], 1
    %s299 = scalar_lea.sflag [#allocation6], 1
    %300 = vsyncpa %s299, 1
    %301 = vsyncpa [#allocation9], 1
    %s302 = scalar_lea.sflag [#allocation9], 1
    %303 = vsyncpa %s302, 1
    %304 = vsyncpa [#allocation7], 1
    %s305 = scalar_lea.sflag [#allocation7], 1
    %306 = vsyncpa %s305, 1

</llo_original>
